<compile_context>
chip_gen: v7x
topology: tpu7x:2x2x1
jax: 0.10.0
libtpu: 0.0.40
codegen_flags: <defaults>
</compile_context>

<pallas_src>
import math

import jax
import jax.numpy as jnp
from jax.experimental import pallas as pl
from jax.experimental.pallas import tpu as pltpu


def _round_up(x, m):
    return ((x + m - 1) // m) * m


def _pick_images_per_step(n):
    """Images per grid step: keep >= 2 parallel steps (v7x has 2 TensorCores),
    batch the rest per step to amortize per-step overhead on long batches."""
    if n < 4:
        return 1
    nb = n // 2
    while n % nb:          # largest NB <= N//2 that divides N
        nb -= 1
    return nb


def _make_conv_kernel(nb, cout, mpad):
    def conv_kernel(p_ref, w_ref, b_ref, o_ref):
        # p_ref: (NB, Kpad, Mpad) bf16    w_ref: (Cout, Kpad) bf16 (resident)
        # b_ref: (Cout, 1) f32 (resident) o_ref: (NB, Cout, Mpad) f32
        w = w_ref[...]
        # Hoisted: one bias broadcast per grid step, not one per image.
        bias = jnp.broadcast_to(b_ref[...], (cout, mpad))
        for i in range(nb):                       # static, unrolled at trace
            # Single lane-dense MXU matmul, bf16 operands, f32 accumulation.
            acc = jnp.dot(w, p_ref[i], preferred_element_type=jnp.float32)
            o_ref[i] = (acc + bias).astype(o_ref.dtype)
    return conv_kernel


def parallel_conv2d_pallas(x_nchw, weight_oikk, bias_o):
    """Forward of ParallelConv2d (world_size == 1).

    x_nchw: (N, Cin, H, W) f32; weight_oikk: (Cout, Cin, K, K) f32;
    bias_o: (Cout,) f32.  Returns (N, Cout, H-K+1, W-K+1) f32.
    """
    N, Cin, H, W = x_nchw.shape
    Cout, _, K, _ = weight_oikk.shape
    Ho, Wo = H - K + 1, W - K + 1
    M = Ho * Wo
    KKC = K * K * Cin
    Mpad = _round_up(M, 128)       # lane-dense output / patch columns
    Kpad = _round_up(KKC, 128)     # lane-dense contraction axis
    NB = _pick_images_per_step(N)
    grid = N // NB

    # ---- wrapper-side layout plumbing (one-off XLA ops, no compute) --------
    # im2col patches; column order (kh, kw, cin) matches the flattened weight.
    x_nhwc = jnp.transpose(x_nchw, (0, 2, 3, 1))                  # (N, H, W, Cin)
    slabs = [x_nhwc[:, kh:kh + Ho, kw:kw + Wo, :]                 # (N, Ho, Wo, Cin)
             for kh in range(K) for kw in range(K)]
    patches = jnp.concatenate(slabs, axis=-1).reshape(N, M, KKC)  # (N, M, KKC)
    patches = jnp.pad(patches, ((0, 0), (0, Mpad - M), (0, Kpad - KKC)))
    patches = jnp.transpose(patches, (0, 2, 1)).astype(jnp.bfloat16)  # (N, Kpad, Mpad)

    # (Cout, Cin, K, K) -> (Cout, K, K, Cin) -> (Cout, KKC), zero-padded lanes.
    w_flat = jnp.transpose(weight_oikk, (0, 2, 3, 1)).reshape(Cout, KKC)
    w_flat = jnp.pad(w_flat, ((0, 0), (0, Kpad - KKC))).astype(jnp.bfloat16)
    b_col = bias_o.reshape(Cout, 1).astype(jnp.float32)

    kernel = _make_conv_kernel(NB, Cout, Mpad)
    out_pad = pl.pallas_call(
        kernel,
        out_shape=jax.ShapeDtypeStruct((N, Cout, Mpad), jnp.float32),
        grid_spec=pltpu.PrefetchScalarGridSpec(
            num_scalar_prefetch=0,
            grid=(grid,),
            in_specs=[
                pl.BlockSpec((NB, Kpad, Mpad), lambda g: (g, 0, 0)),
                pl.BlockSpec((Cout, Kpad), lambda g: (0, 0)),     # resident weight
                pl.BlockSpec((Cout, 1), lambda g: (0, 0)),        # resident bias
            ],
            out_specs=pl.BlockSpec((NB, Cout, Mpad), lambda g: (g, 0, 0)),
        ),
        compiler_params=pltpu.CompilerParams(
            dimension_semantics=("parallel",)),
    )(patches, w_flat, b_col)

    # Padding lanes carry only bias; slice them off, then a free reshape.
    return out_pad[:, :, :M].reshape(N, Cout, Ho, Wo)


def init_params(key, in_features, out_features, k=5, gain=0.1):
    """Deterministic xavier_normal_(gain) for conv weight, zero bias."""
    fan_in = in_features * k * k
    fan_out = out_features * k * k
    std = gain * math.sqrt(2.0 / (fan_in + fan_out))
    weight = std * jax.random.normal(
        key, (out_features, in_features, k, k), dtype=jnp.float32)
    bias = jnp.zeros((out_features,), dtype=jnp.float32)
    return weight, bias


if __name__ == "__main__":
    # Small shapes: batch=2, in_features=4, out_features=8, spatial=16x16.
    N, Cin, H, W = 2, 4, 16, 16
    Cout, K = 8, 5

    key = jax.random.PRNGKey(0)
    kx, kw = jax.random.split(key)
    x = jax.random.normal(kx, (N, Cin, H, W), dtype=jnp.float32)
    weight, bias = init_params(kw, Cin, Cout, K, gain=0.1)

    out = parallel_conv2d_pallas(x, weight, bias)
    out = jax.block_until_ready(out)
    assert out.shape == (N, Cout, H - K + 1, W - K + 1)

    # Tight check: XLA conv fed the same bf16-quantized inputs the kernel's
    # MXU path uses (bf16 products are exact in f32; accumulation is f32).
    xq = x.astype(jnp.bfloat16).astype(jnp.float32)
    wq = weight.astype(jnp.bfloat16).astype(jnp.float32)
    ref_q = jax.lax.conv_general_dilated(
        xq, wq, window_strides=(1, 1), padding="VALID",
        dimension_numbers=("NCHW", "OIHW", "NCHW"),
        precision=jax.lax.Precision.HIGHEST) + bias[None, :, None, None]
    assert jnp.allclose(out, ref_q, atol=1e-4, rtol=1e-4)

    # Module-level check: full-f32 reference; only bf16 input rounding differs.
    ref_f32 = jax.lax.conv_general_dilated(
        x, weight, window_strides=(1, 1), padding="VALID",
        dimension_numbers=("NCHW", "OIHW", "NCHW"),
        precision=jax.lax.Precision.HIGHEST) + bias[None, :, None, None]
    assert jnp.allclose(out, ref_f32, atol=1e-2, rtol=1e-2)

    print("KERNEL_OK")
</pallas_src>

<mosaic_0001>
module attributes {stable_mosaic.version = 11 : i64} {
  func.func @conv_kernel(%arg0: i32, %arg1: memref<1x128x256xbf16, #tpu.memory_space<vmem>>, %arg2: memref<8x128xbf16, #tpu.memory_space<vmem>>, %arg3: memref<8x1xf32, #tpu.memory_space<vmem>>, %arg4: memref<1x8x256xf32, #tpu.memory_space<vmem>>) attributes {dimension_semantics = [#tpu.dimension_semantics<parallel>], iteration_bounds = array<i64: 2>, scalar_prefetch = 0 : i64, scratch_operands = 0 : i64, tpu.core_type = #tpu.core_type<tc>, window_params = [{transform_indices = @transform_0, window_bounds = array<i64: 1, 128, 256>}, {pipeline_mode = #tpu.pipeline_mode<synchronous>, transform_indices = @transform_1, window_bounds = array<i64: 8, 128>}, {pipeline_mode = #tpu.pipeline_mode<synchronous>, transform_indices = @transform_2, window_bounds = array<i64: 8, 1>}, {transform_indices = @transform_3, window_bounds = array<i64: 1, 8, 256>}]} {
    %c0 = arith.constant 0 : index
    %c0_0 = arith.constant 0 : index
    %0 = vector.load %arg2[%c0, %c0_0] : memref<8x128xbf16, #tpu.memory_space<vmem>>, vector<8x128xbf16>
    %c0_1 = arith.constant 0 : index
    %c0_2 = arith.constant 0 : index
    %1 = vector.load %arg3[%c0_1, %c0_2] : memref<8x1xf32, #tpu.memory_space<vmem>>, vector<8x1xf32>
    %2 = vector.shape_cast %1 : vector<8x1xf32> to vector<8x1xf32>
    %3 = vector.broadcast %2 : vector<8x1xf32> to vector<8x256xf32>
    %c0_3 = arith.constant 0 : index
    %c0_4 = arith.constant 0 : index
    %c0_5 = arith.constant 0 : index
    %4 = vector.load %arg1[%c0_3, %c0_4, %c0_5] : memref<1x128x256xbf16, #tpu.memory_space<vmem>>, vector<1x128x256xbf16>
    %5 = vector.shape_cast %4 : vector<1x128x256xbf16> to vector<128x256xbf16>
    %cst = arith.constant dense<0.000000e+00> : vector<8x256xf32>
    %6 = tpu.matmul %0, %5, %cst {dimension_numbers = #tpu.dot_dimension_numbers<[1], [0], [0], [1], [0, 0, 1, 1], [], []>} : vector<8x128xbf16>, vector<128x256xbf16>, vector<8x256xf32> -> vector<8x256xf32>
    %7 = arith.addf %6, %3 : vector<8x256xf32>
    %c0_6 = arith.constant 0 : index
    %c0_7 = arith.constant 0 : index
    %c0_8 = arith.constant 0 : index
    %8 = vector.load %arg4[%c0_6, %c0_7, %c0_8] : memref<1x8x256xf32, #tpu.memory_space<vmem>>, vector<1x8x256xf32>
    %9 = vector.shape_cast %8 : vector<1x8x256xf32> to vector<8x256xf32>
    %10 = vector.shape_cast %7 : vector<8x256xf32> to vector<1x8x256xf32>
    tpu.vector_store %arg4[%c0_6, %c0_7, %c0_8], %10 {strides = array<i32>} : memref<1x8x256xf32, #tpu.memory_space<vmem>>, vector<1x8x256xf32>,
    return
  }
  func.func @transform_0(%arg0: i32) -> (i32, i32, i32) {
    %c0_i32 = arith.constant 0 : i32
    %c0_i32_0 = arith.constant 0 : i32
    %c0_i32_1 = arith.constant 0 : i32
    return %arg0, %c0_i32, %c0_i32_0 : i32, i32, i32
  }
  func.func @transform_1(%arg0: i32) -> (i32, i32) {
    %c0_i32 = arith.constant 0 : i32
    %c0_i32_0 = arith.constant 0 : i32
    %c0_i32_1 = arith.constant 0 : i32
    return %c0_i32, %c0_i32_0 : i32, i32
  }
  func.func @transform_2(%arg0: i32) -> (i32, i32) {
    %c0_i32 = arith.constant 0 : i32
    %c0_i32_0 = arith.constant 0 : i32
    %c0_i32_1 = arith.constant 0 : i32
    return %c0_i32, %c0_i32_0 : i32, i32
  }
  func.func @transform_3(%arg0: i32) -> (i32, i32, i32) {
    %c0_i32 = arith.constant 0 : i32
    %c0_i32_0 = arith.constant 0 : i32
    %c0_i32_1 = arith.constant 0 : i32
    return %arg0, %c0_i32, %c0_i32_0 : i32, i32, i32
  }
}

</mosaic_0001>

<llo_original>
// kernel: tpu_custom_call.1
$region0: #{tpu_custom_call.1}
  #allocation0 [shape = 'u32[]', space=smem, size = 0x4, offset = 0x4, fixed_abs, tag = 'smem constant byte address 0x4 - core index']
  #allocation1 [shape = 'u32[144,128]{1,0:T(1,128)}', space=vmem, size = 0x12000, scoped, tag = 'internal scratch']
  %s0 = inlined_call_operand.hbm [shape: bf16[2,128,256], index: 0, kind: input, shape index: {}]
  %s1 = inlined_call_operand.vmem [shape: bf16[8,128], index: 1, kind: input, shape index: {}]
  %s2 = inlined_call_operand.vmem [shape: f32[8,1], index: 2, kind: input, shape index: {}]
  %s3 = inlined_call_operand.hbm [shape: f32[2,8,256], index: 3, kind: output, shape index: {}]
  %s4 = sld [smem:[#allocation0]]
  $region49: #{tpu_custom_call.1} parent=0
    _
  %s6 = ssub.s32 1, %s4
  %s7 = scalar_select 0, %s6, %s4
  $region1: #{tpu_custom_call.1} parent=0
    #allocation2 [shape = 'u8[131072]{0}', space=vmem, size = 0x20000, scoped, tag = 'input window, operand 0']
    #allocation3 [shape = 's32[2]{0}', space=sflag, size = 0x8, scoped, tag = 'scoped memory for tpu_custom_call.1']
    #allocation4 [shape = 's32[2]{0}', space=sflag, size = 0x8, scoped, tag = 'scoped memory for tpu_custom_call.1']
    #allocation5 [shape = 'u8[16384]{0}', space=vmem, size = 0x4000, scoped, tag = 'output window, operand 0']
    %8 = vsyncpa [#allocation3], 0
    %s9 = scalar_lea.sflag [#allocation3], 1
    %10 = vsyncpa %s9, 0
    %11 = vsyncpa [#allocation4], 0
    %s12 = scalar_lea.sflag [#allocation4], 1
    %13 = vsyncpa %s12, 0
    loop: start=0, step=1, limit=4
    $region2: #{tpu_custom_call.1} parent=1 // loop_pre_header
      _
    $region3: #{tpu_custom_call.1} parent=1 // loop_header
      %s15 = sphi 0, %s19
      %p16 = scmp.ge.s32.totalorder %s15, 4
      %s25 = sphi 0, %s27
      %s28 = sphi 0, %s25
      %s29 = sphi 0, %s28
      %s45 = sphi 0, %s29
      %s49 = sphi 0, %s49
      %s51 = sphi 0, %s49
      %s52 = sphi 0, %s51
      %s66 = sphi 0, %s52
      %s70 = sphi 0, %s70
      %s72 = sphi 0, %s70
      %s73 = sphi 0, %s72
      %s87 = sphi 0, %s73
      %s93 = sphi 0, %s95
      %s96 = sphi 0, %s93
      %s97 = sphi 0, %s96
      %s113 = sphi 0, %s97
    $region4: #{tpu_custom_call.1} parent=1 // loop_header_branch
      %18 = sbr.rel (%p16) target = $region8
    $region5: #{tpu_custom_call.1} parent=1 // loop_body
      %s20 = ssub.s32 %s15, 1
      %s21 = ssub.s32 %s15, 2
      %s22 = sadd.s32 %s15, 1
      %s23 = ssub.s32 %s15, %s22
      %p24 = scmp.eq.s32.totalorder %s23, 0
      %s26 = sadd.s32 %s25, 1
      %s27 = scalar_select %p24, %s25, %s26
      %p30 = pneg %p24
      %p31 = scmp.eq.s32.totalorder %s15, 1
      %p32 = por %p30, %p31
      %p33 = scmp.ne.s32.totalorder %s25, %s28
      %p34 = scmp.eq.s32.totalorder %s15, 0
      %p35 = por %p33, %p34
      %p36 = scmp.ne.s32.totalorder %s25, %s28
      %p37 = scmp.eq.s32.totalorder %s20, 1
      %p38 = por %p36, %p37
      %p39 = scmp.ne.s32.totalorder %s28, %s29
      %p40 = scmp.eq.s32.totalorder %s20, 0
      %p41 = por %p39, %p40
      %p42 = scmp.ne.s32.totalorder %s28, %s29
      %p43 = scmp.eq.s32.totalorder %s21, 1
      %p44 = por %p42, %p43
      %p46 = scmp.ne.s32.totalorder %s29, %s45
      %p47 = scmp.eq.s32.totalorder %s21, 0
      %p48 = por %p46, %p47
      %s50 = sadd.s32 %s49, 1
      %p53 = scmp.eq.s32.totalorder %s15, 1
      %p54 = scmp.ne.s32.totalorder %s49, %s51
      %p55 = scmp.eq.s32.totalorder %s15, 0
      %p56 = por %p54, %p55
      %p57 = scmp.ne.s32.totalorder %s49, %s51
      %p58 = scmp.eq.s32.totalorder %s20, 1
      %p59 = por %p57, %p58
      %p60 = scmp.ne.s32.totalorder %s51, %s52
      %p61 = scmp.eq.s32.totalorder %s20, 0
      %p62 = por %p60, %p61
      %p63 = scmp.ne.s32.totalorder %s51, %s52
      %p64 = scmp.eq.s32.totalorder %s21, 1
      %p65 = por %p63, %p64
      %p67 = scmp.ne.s32.totalorder %s52, %s66
      %p68 = scmp.eq.s32.totalorder %s21, 0
      %p69 = por %p67, %p68
      %s71 = sadd.s32 %s70, 1
      %p74 = scmp.eq.s32.totalorder %s15, 1
      %p75 = scmp.ne.s32.totalorder %s70, %s72
      %p76 = scmp.eq.s32.totalorder %s15, 0
      %p77 = por %p75, %p76
      %p78 = scmp.ne.s32.totalorder %s70, %s72
      %p79 = scmp.eq.s32.totalorder %s20, 1
      %p80 = por %p78, %p79
      %p81 = scmp.ne.s32.totalorder %s72, %s73
      %p82 = scmp.eq.s32.totalorder %s20, 0
      %p83 = por %p81, %p82
      %p84 = scmp.ne.s32.totalorder %s72, %s73
      %p85 = scmp.eq.s32.totalorder %s21, 1
      %p86 = por %p84, %p85
      %p88 = scmp.ne.s32.totalorder %s73, %s87
      %p89 = scmp.eq.s32.totalorder %s21, 0
      %p90 = por %p88, %p89
      %s91 = ssub.s32 %s15, %s22
      %p92 = scmp.eq.s32.totalorder %s91, 0
      %s94 = sadd.s32 %s93, 1
      %s95 = scalar_select %p92, %s93, %s94
      %p98 = pneg %p92
      %p99 = scmp.eq.s32.totalorder %s15, 1
      %p100 = por %p98, %p99
      %p101 = scmp.ne.s32.totalorder %s93, %s96
      %p102 = scmp.eq.s32.totalorder %s15, 0
      %p103 = por %p101, %p102
      %p104 = scmp.ne.s32.totalorder %s93, %s96
      %p105 = scmp.eq.s32.totalorder %s20, 1
      %p106 = por %p104, %p105
      %p107 = scmp.ne.s32.totalorder %s96, %s97
      %p108 = scmp.eq.s32.totalorder %s20, 0
      %p109 = por %p107, %p108
      %p110 = scmp.ne.s32.totalorder %s96, %s97
      %p111 = scmp.eq.s32.totalorder %s21, 1
      %p112 = por %p110, %p111
      %p114 = scmp.ne.s32.totalorder %s97, %s113
      %p115 = scmp.eq.s32.totalorder %s21, 0
      %p116 = por %p114, %p115
      %p117 = scmp.le.s32.totalorder 1, %s15
      %p118 = scmp.lt.s32.totalorder %s15, 3
      %p119 = pnand %p117, %p118
      %p120 = pneg %p119
      // Predicated region
      $region9: #{tpu_custom_call.1} parent=5 // pred_check
        _
      $region10: #{tpu_custom_call.1} parent=5 // pred_check_branch
        %122 = sbr.rel (%p119) target = $region12
      $region11: #{tpu_custom_call.1} parent=5 // pred_region
        %s123 = ssub.s32 %s15, 1
        // Predicated region
        $region13: #{tpu_custom_call.1} parent=11 // pred_check
          %p124 = pneg %p62
        $region14: #{tpu_custom_call.1} parent=11 // pred_check_branch
          %126 = sbr.rel (%p124) target = $region16
        $region15: #{tpu_custom_call.1} parent=11 // pred_region
          _
        $region16: #{tpu_custom_call.1} parent=11 // pred_fallthru
          _
        // Predicated region
        $region17: #{tpu_custom_call.1} parent=11 // pred_check
          %p127 = pneg %p83
        $region18: #{tpu_custom_call.1} parent=11 // pred_check_branch
          %129 = sbr.rel (%p127) target = $region20
        $region19: #{tpu_custom_call.1} parent=11 // pred_region
          _
        $region20: #{tpu_custom_call.1} parent=11 // pred_fallthru
          _
      $region12: #{tpu_custom_call.1} parent=5 // pred_fallthru
        _
      %p130 = scmp.lt.s32.totalorder %s15, 2
      // Predicated region
      $region21: #{tpu_custom_call.1} parent=5 // pred_check
        %p131 = pneg %p130
      $region22: #{tpu_custom_call.1} parent=5 // pred_check_branch
        %133 = sbr.rel (%p131) target = $region24
      $region23: #{tpu_custom_call.1} parent=5 // pred_region
        // Predicated region
        $region25: #{tpu_custom_call.1} parent=23 // pred_check
          %p134 = pneg %p35
        $region26: #{tpu_custom_call.1} parent=23 // pred_check_branch
          %136 = sbr.rel (%p134) target = $region28
        $region27: #{tpu_custom_call.1} parent=23 // pred_region
          %s137 = sand.u32 %s25, 1
          %s138 = scalar_lea.sflag [#allocation3], %s137
          %s139 = sand.u32 %s25, 1
          %s140 = smul.addr %s139, 128
          %s141 = scalar_lea.vmem [#allocation2], %s140
          %s143 = ssub.s32 2048, 2048
          %144 = vsyncadd %s138, %s143
          %s145 = smul.addr %s15, 32
          %s146 = smul.addr %s145, 64
          %s147 = scalar_lea.hbm %s0, %s146
          %s148 = sshll.u32 %s141, 4
          %s149 = int_to_ptr.vmem [resolvable:$true] %s148
          %154 = dma.hbm_to_vmem [thread:$0]  %s147, 2048, %s149, %s138, 128, 128, 8
        $region28: #{tpu_custom_call.1} parent=23 // pred_fallthru
          _
      $region24: #{tpu_custom_call.1} parent=5 // pred_fallthru
        _
      %p155 = scmp.le.s32.totalorder 1, %s15
      %p156 = scmp.lt.s32.totalorder %s15, 3
      %p157 = pnand %p155, %p156
      %p158 = pneg %p157
      // Predicated region
      $region29: #{tpu_custom_call.1} parent=5 // pred_check
        _
      $region30: #{tpu_custom_call.1} parent=5 // pred_check_branch
        %160 = sbr.rel (%p157) target = $region32
      $region31: #{tpu_custom_call.1} parent=5 // pred_region
        %s161 = ssub.s32 %s15, 1
        %s162 = sand.u32 %s28, 1
        %s163 = scalar_lea.sflag [#allocation3], %s162
        %s164 = sand.u32 %s28, 1
        %s165 = smul.addr %s164, 128
        %s166 = scalar_lea.vmem [#allocation2], %s165
        // Predicated region
        $region33: #{tpu_custom_call.1} parent=31 // pred_check
          %p167 = pneg %p41
        $region34: #{tpu_custom_call.1} parent=31 // pred_check_branch
          %169 = sbr.rel (%p167) target = $region36
        $region35: #{tpu_custom_call.1} parent=31 // pred_region
          %170 = dma.done %s163, 2048
        $region36: #{tpu_custom_call.1} parent=31 // pred_fallthru
          _
        %s171 = sand.u32 %s28, 1
        %s172 = scalar_lea.sflag [#allocation3], %s171
        %s173 = sand.u32 %s28, 1
        %s174 = smul.addr %s173, 128
        %s175 = scalar_lea.vmem [#allocation2], %s174
        %p176 = pneg %p41
        %p177 = pneg %p38
        %p178 = pneg %p62
        %p179 = pneg %p59
        %p180 = pneg %p83
        %p181 = pneg %p80
        %p182 = pneg %p109
        %p183 = pneg %p106
        %s184 = sand.u32 %s96, 1
        %s185 = scalar_lea.sflag [#allocation4], %s184
        %s186 = sand.u32 %s96, 1
        %s187 = smul.addr %s186, 16
        %s188 = scalar_lea.vmem [#allocation5], %s187
        %v190 = vld [vmem:[%s1] sm:$0xf]
        %v191 = vld [vmem:[%s2] sm:$0xff]
        %193 = vset.pattern.permute.xlu0 0
        %194 = vperm.xlu0 %193, %v191
        %v195 = vpop.permute.xlu0 %194
        %v197 = vld [vmem:[%s166] sm:$0xff]
        %v198 = vld [vmem:[%s166 + $0x8] sm:$0xff]
        %v199 = vld [vmem:[%s166 + $0x10] sm:$0xff]
        %v200 = vld [vmem:[%s166 + $0x18] sm:$0xff]
        %v201 = vld [vmem:[%s166 + $0x20] sm:$0xff]
        %v202 = vld [vmem:[%s166 + $0x28] sm:$0xff]
        %v203 = vld [vmem:[%s166 + $0x30] sm:$0xff]
        %v204 = vld [vmem:[%s166 + $0x38] sm:$0xff]
        %v205 = vld [vmem:[%s166 + $0x40] sm:$0xff]
        %v206 = vld [vmem:[%s166 + $0x48] sm:$0xff]
        %v207 = vld [vmem:[%s166 + $0x50] sm:$0xff]
        %v208 = vld [vmem:[%s166 + $0x58] sm:$0xff]
        %v209 = vld [vmem:[%s166 + $0x60] sm:$0xff]
        %v210 = vld [vmem:[%s166 + $0x68] sm:$0xff]
        %v211 = vld [vmem:[%s166 + $0x70] sm:$0xff]
        %v212 = vld [vmem:[%s166 + $0x78] sm:$0xff]
        %v229 = vunpack.c.l.b16 %v197
        %v230 = vunpack.c.h.b16 %v197
        %v231 = vunpack.c.l.b16 %v198
        %v232 = vunpack.c.h.b16 %v198
        %v233 = vunpack.c.l.b16 %v199
        %v234 = vunpack.c.h.b16 %v199
        %v235 = vunpack.c.l.b16 %v200
        %v236 = vunpack.c.h.b16 %v200
        %v237 = vunpack.c.l.b16 %v201
        %v238 = vunpack.c.h.b16 %v201
        %v239 = vunpack.c.l.b16 %v202
        %v240 = vunpack.c.h.b16 %v202
        %v241 = vunpack.c.l.b16 %v203
        %v242 = vunpack.c.h.b16 %v203
        %v243 = vunpack.c.l.b16 %v204
        %v244 = vunpack.c.h.b16 %v204
        %v245 = vunpack.c.l.b16 %v205
        %v246 = vunpack.c.h.b16 %v205
        %v247 = vunpack.c.l.b16 %v206
        %v248 = vunpack.c.h.b16 %v206
        %v249 = vunpack.c.l.b16 %v207
        %v250 = vunpack.c.h.b16 %v207
        %v251 = vunpack.c.l.b16 %v208
        %v252 = vunpack.c.h.b16 %v208
        %v253 = vunpack.c.l.b16 %v209
        %v254 = vunpack.c.h.b16 %v209
        %v255 = vunpack.c.l.b16 %v210
        %v256 = vunpack.c.h.b16 %v210
        %v257 = vunpack.c.l.b16 %v211
        %v258 = vunpack.c.h.b16 %v211
        %v259 = vunpack.c.l.b16 %v212
        %v260 = vunpack.c.h.b16 %v212
        %v261 = vpack.c.b16 %v231, %v229
        %v262 = vpack.c.b16 %v232, %v230
        %v263 = vpack.c.b16 %v235, %v233
        %v264 = vpack.c.b16 %v236, %v234
        %v265 = vpack.c.b16 %v239, %v237
        %v266 = vpack.c.b16 %v240, %v238
        %v267 = vpack.c.b16 %v243, %v241
        %v268 = vpack.c.b16 %v244, %v242
        %v269 = vpack.c.b16 %v247, %v245
        %v270 = vpack.c.b16 %v248, %v246
        %v271 = vpack.c.b16 %v251, %v249
        %v272 = vpack.c.b16 %v252, %v250
        %v273 = vpack.c.b16 %v255, %v253
        %v274 = vpack.c.b16 %v256, %v254
        %v275 = vpack.c.b16 %v259, %v257
        %v276 = vpack.c.b16 %v260, %v258
        %293 = vmatprep.subr.bf16.mxu0 %v262
        %294 = vmatpush1.bf16.msra.mxu0 %v261
        %295 = vmatprep.subr.bf16.mxu0 %v264
        %296 = vmatpush1.bf16.msra.mxu0 %v263
        %297 = vmatprep.subr.bf16.mxu0 %v266
        %298 = vmatpush1.bf16.msra.mxu0 %v265
        %299 = vmatprep.subr.bf16.mxu0 %v268
        %300 = vmatpush1.bf16.msra.mxu0 %v267
        %301 = vmatprep.subr.bf16.mxu0 %v270
        %302 = vmatpush1.bf16.msra.mxu0 %v269
        %303 = vmatprep.subr.bf16.mxu0 %v272
        %304 = vmatpush1.bf16.msra.mxu0 %v271
        %305 = vmatprep.subr.bf16.mxu0 %v274
        %306 = vmatpush1.bf16.msra.mxu0 %v273
        %307 = vmatprep.subr.bf16.mxu0 %v276
        %308 = vmatpush1.bf16.msra.mxu0 %v275
        %309 = vmatprep.subr.bf16.mxu0 0
        %310 = vmatpush1.bf16.msra.mxu0 0
        %311 = vmatprep.subr.bf16.mxu0 0
        %312 = vmatpush1.bf16.msra.mxu0 0
        %313 = vmatprep.subr.bf16.mxu0 0
        %314 = vmatpush1.bf16.msra.mxu0 0
        %315 = vmatprep.subr.bf16.mxu0 0
        %316 = vmatpush1.bf16.msra.mxu0 0
        %317 = vmatprep.subr.bf16.mxu0 0
        %318 = vmatpush1.bf16.msra.mxu0 0
        %319 = vmatprep.subr.bf16.mxu0 0
        %320 = vmatpush1.bf16.msra.mxu0 0
        %321 = vmatprep.subr.bf16.mxu0 0
        %322 = vmatpush1.bf16.msra.mxu0 0
        %323 = vmatprep.subr.bf16.mxu0 0
        %324 = vmatpush1.bf16.msra.mxu0 0
        %325 = vmatprep.mubr.bf16.mxu0 0
        %326 = vmatmul.mubr.bf16.gmra.mrb[0].mxu0 %v190
        %v327 = vpop.f32.mrb[0].mxu0
        %v328 = vadd.f32 %v195, %v327
        %v329 = vpop.f32.mrb[0].mxu0
        %v330 = vadd.f32 %v195, %v329
        %v331 = vpop.f32.mrb[0].mxu0
        %v332 = vpop.f32.mrb[0].mxu0
        %333 = vdwg.mxu0
        %334 = vst [vmem:[%s188] sm:$0xff] %v328
        %335 = vst [vmem:[%s188 + $0x8] sm:$0xff] %v330
        %s336 = sand.u32 %s96, 1
        %s337 = scalar_lea.sflag [#allocation4], %s336
        %s338 = sand.u32 %s96, 1
        %s339 = smul.addr %s338, 16
        %s340 = scalar_lea.vmem [#allocation5], %s339
        // Predicated region
        $region37: #{tpu_custom_call.1} parent=31 // pred_check
          %p341 = pneg %p106
        $region38: #{tpu_custom_call.1} parent=31 // pred_check_branch
          %343 = sbr.rel (%p341) target = $region40
        $region39: #{tpu_custom_call.1} parent=31 // pred_region
          %s345 = ssub.s32 256, 256
          %346 = vsyncadd %s337, %s345
          %s347 = smul.addr %s20, 2
          %s348 = smul.addr %s347, 128
          %s349 = scalar_lea.hbm %s3, %s348
          %s351 = sshll.u32 %s340, 4
          %s352 = int_to_ptr.vmem [resolvable:$true] %s351
          %354 = dma.vmem_to_hbm [thread:$0]  %s352, 256, %s349, %s337
        $region40: #{tpu_custom_call.1} parent=31 // pred_fallthru
          _
      $region32: #{tpu_custom_call.1} parent=5 // pred_fallthru
        _
      %p355 = scmp.le.s32.totalorder 2, %s15
      // Predicated region
      $region41: #{tpu_custom_call.1} parent=5 // pred_check
        %p356 = pneg %p355
      $region42: #{tpu_custom_call.1} parent=5 // pred_check_branch
        %358 = sbr.rel (%p356) target = $region44
      $region43: #{tpu_custom_call.1} parent=5 // pred_region
        %s359 = ssub.s32 %s15, 2
        // Predicated region
        $region45: #{tpu_custom_call.1} parent=43 // pred_check
          %p360 = pneg %p112
        $region46: #{tpu_custom_call.1} parent=43 // pred_check_branch
          %362 = sbr.rel (%p360) target = $region48
        $region47: #{tpu_custom_call.1} parent=43 // pred_region
          %s363 = sand.u32 %s97, 1
          %s364 = scalar_lea.sflag [#allocation4], %s363
          %s365 = sand.u32 %s97, 1
          %s366 = smul.addr %s365, 16
          %s367 = scalar_lea.vmem [#allocation5], %s366
          %368 = dma.done %s364, 256
        $region48: #{tpu_custom_call.1} parent=43 // pred_fallthru
          _
      $region44: #{tpu_custom_call.1} parent=5 // pred_fallthru
        _
    $region6: #{tpu_custom_call.1} parent=1 // loop_footer
      %s19 = sadd.s32 1, %s15
    $region7: #{tpu_custom_call.1} parent=1 // loop_footer_branch
      %14 = sbr.rel target = $region3
    $region8: #{tpu_custom_call.1} parent=1 // loop_exit
      _
    %369 = vsyncpa [#allocation3], 1
    %s370 = scalar_lea.sflag [#allocation3], 1
    %371 = vsyncpa %s370, 1
    %372 = vsyncpa [#allocation4], 1
    %s373 = scalar_lea.sflag [#allocation4], 1
    %374 = vsyncpa %s373, 1

</llo_original>
